<compile_context>
chip_gen: v5e
topology: v5e:2x2
jax: 0.10.0
libtpu: 0.0.40
codegen_flags: <defaults>
</compile_context>

<pallas_src>
import functools

import numpy as np
import jax
import jax.numpy as jnp
from jax.experimental import pallas as pl
from jax.experimental.pallas import tpu as pltpu


# -----------------------------------------------------------------------------
# Generation-aware VMEM budget
# -----------------------------------------------------------------------------
def _vmem_limit_bytes():
    cap = 64 * 1024 * 1024
    try:
        cap = int(getattr(pltpu.get_tpu_info(), "vmem_capacity_bytes", cap))
    except Exception:
        pass
    # 3/4 of physical, capped at 96 MiB: 48 MiB on v7x (64 MiB), 96 MiB on v5e/v6e.
    return min(96 * 1024 * 1024, (cap * 3) // 4)


_VMEM_LIMIT = _vmem_limit_bytes()
_TILE_BUDGET = max(8 * 1024 * 1024, _VMEM_LIMIT // 3)


def _cparams(*sem):
    return pltpu.CompilerParams(dimension_semantics=sem,
                                vmem_limit_bytes=_VMEM_LIMIT)


def _pick_tile(M, row_bytes, budget=None):
    """Largest row tile (mult of 8) dividing M, fitting budget, >=2 grid steps."""
    budget = budget or _TILE_BUDGET
    max_tm = max(8, min(512, budget // max(row_bytes, 1)))
    if M >= 16:
        max_tm = min(max_tm, M // 2)      # >=2 grid steps so v7x's 2nd TC has work
    for tm in (512, 256, 128, 64, 32, 16, 8):
        if tm <= max_tm and M % tm == 0:
            return tm, M
    Mp = ((M + 7) // 8) * 8               # ragged tiny M (e.g. SE fc): pad to 8
    return 8, Mp


def _pick_group(n, cap=8, min_steps=2):
    cap = max(1, min(cap, n // min_steps if n >= min_steps else n))
    for g in range(min(cap, n), 0, -1):
        if n % g == 0:
            return g
    return 1


def _pick_group_attn(B_, nW, masked):
    cap = min(8, max(1, B_ // 2))         # >=2 grid steps when possible
    for g in range(cap, 0, -1):
        if B_ % g == 0 and (not masked or nW <= 1 or nW % g == 0):
            return g
    return 1


# =============================================================================
# Pallas kernels
# =============================================================================

def _mm_kernel(*refs, act, has_res):
    if has_res:
        x_ref, w_ref, b_ref, res_ref, o_ref = refs
    else:
        x_ref, w_ref, b_ref, o_ref = refs
    acc = jnp.dot(x_ref[...], w_ref[...], preferred_element_type=jnp.float32)
    acc = acc + b_ref[...]
    if act == "relu":
        acc = jnp.maximum(acc, 0.0)
    elif act == "sigmoid":
        acc = jax.nn.sigmoid(acc)
    elif act == "gelu":
        # TODO(synk): tanh-approximate GELU (guaranteed Mosaic lowering);
        # nn.GELU default is exact erf, max abs diff ~1e-3.
        acc = jax.nn.gelu(acc, approximate=True)
    if has_res:
        acc = acc + res_ref[...].astype(jnp.float32)
    o_ref[...] = acc.astype(o_ref.dtype)


def pallas_matmul(x, w, b=None, act="none", res=None, out_dtype=jnp.bfloat16):
    """(M, K) @ (K, N) + bias with optional fused activation and residual add."""
    M, K = x.shape
    N = w.shape[1]
    x = x.astype(jnp.bfloat16)
    w = w.astype(jnp.bfloat16)
    b2 = (jnp.zeros((1, N), jnp.float32) if b is None
          else b.astype(jnp.float32).reshape(1, N))
    has_res = res is not None
    tm, Mp = _pick_tile(M, 4 * (K + N))
    if Mp != M:
        x = jnp.pad(x, ((0, Mp - M), (0, 0)))
    args = [x, w, b2]
    in_specs = [pl.BlockSpec((tm, K), lambda i: (i, 0)),
                pl.BlockSpec((K, N), lambda i: (0, 0)),
                pl.BlockSpec((1, N), lambda i: (0, 0))]
    if has_res:
        res = res.astype(jnp.bfloat16)
        if Mp != M:
            res = jnp.pad(res, ((0, Mp - M), (0, 0)))
        args.append(res)
        in_specs.append(pl.BlockSpec((tm, N), lambda i: (i, 0)))
    out = pl.pallas_call(
        functools.partial(_mm_kernel, act=act, has_res=has_res),
        out_shape=jax.ShapeDtypeStruct((Mp, N), out_dtype),
        grid_spec=pltpu.PrefetchScalarGridSpec(
            num_scalar_prefetch=0,
            grid=(Mp // tm,),
            in_specs=in_specs,
            out_specs=pl.BlockSpec((tm, N), lambda i: (i, 0)),
        ),
        compiler_params=_cparams("parallel"),
    )(*args)
    return out if Mp == M else out[:M]


def _ln_mm_kernel(x_ref, g_ref, b_ref, w_ref, bias_ref, o_ref, *, eps, act):
    x = x_ref[...].astype(jnp.float32)
    mu = jnp.mean(x, axis=-1, keepdims=True)
    var = jnp.mean(jnp.square(x - mu), axis=-1, keepdims=True)
    y = (x - mu) * jax.lax.rsqrt(var + eps)
    y = y * g_ref[...] + b_ref[...]
    acc = jnp.dot(y.astype(jnp.bfloat16), w_ref[...],
                  preferred_element_type=jnp.float32)
    acc = acc + bias_ref[...]
    if act == "gelu":
        acc = jax.nn.gelu(acc, approximate=True)
    elif act == "relu":
        acc = jnp.maximum(acc, 0.0)
    o_ref[...] = acc.astype(o_ref.dtype)


def pallas_ln_matmul(x, ln_g, ln_b, w, bias=None, act="none", eps=1e-5):
    """LayerNorm fused into the consuming matmul: LN(x) @ W + b (+act)."""
    M, K = x.shape
    N = w.shape[1]
    x = x.astype(jnp.bfloat16)
    w = w.astype(jnp.bfloat16)
    g2 = ln_g.astype(jnp.float32).reshape(1, K)
    b2 = ln_b.astype(jnp.float32).reshape(1, K)
    bias2 = (jnp.zeros((1, N), jnp.float32) if bias is None
             else bias.astype(jnp.float32).reshape(1, N))
    tm, Mp = _pick_tile(M, 4 * (K + N))
    if Mp != M:
        x = jnp.pad(x, ((0, Mp - M), (0, 0)))
    out = pl.pallas_call(
        functools.partial(_ln_mm_kernel, eps=eps, act=act),
        out_shape=jax.ShapeDtypeStruct((Mp, N), jnp.bfloat16),
        grid_spec=pltpu.PrefetchScalarGridSpec(
            num_scalar_prefetch=0,
            grid=(Mp // tm,),
            in_specs=[pl.BlockSpec((tm, K), lambda i: (i, 0)),
                      pl.BlockSpec((1, K), lambda i: (0, 0)),
                      pl.BlockSpec((1, K), lambda i: (0, 0)),
                      pl.BlockSpec((K, N), lambda i: (0, 0)),
                      pl.BlockSpec((1, N), lambda i: (0, 0))],
            out_specs=pl.BlockSpec((tm, N), lambda i: (i, 0)),
        ),
        compiler_params=_cparams("parallel"),
    )(x, g2, b2, w, bias2)
    return out if Mp == M else out[:M]


def _layernorm_kernel(x_ref, g_ref, b_ref, o_ref, *, eps):
    x = x_ref[...].astype(jnp.float32)
    mu = jnp.mean(x, axis=-1, keepdims=True)
    var = jnp.mean(jnp.square(x - mu), axis=-1, keepdims=True)
    y = (x - mu) * jax.lax.rsqrt(var + eps)
    o_ref[...] = (y * g_ref[...] + b_ref[...]).astype(o_ref.dtype)


def pallas_layernorm(x, g, b, eps=1e-5):
    shape = x.shape
    C = shape[-1]
    x2 = x.reshape(-1, C).astype(jnp.bfloat16)
    M = x2.shape[0]
    tm, Mp = _pick_tile(M, 8 * C)
    if Mp != M:
        x2 = jnp.pad(x2, ((0, Mp - M), (0, 0)))
    out = pl.pallas_call(
        functools.partial(_layernorm_kernel, eps=eps),
        out_shape=jax.ShapeDtypeStruct((Mp, C), jnp.bfloat16),
        grid_spec=pltpu.PrefetchScalarGridSpec(
            num_scalar_prefetch=0,
            grid=(Mp // tm,),
            in_specs=[pl.BlockSpec((tm, C), lambda i: (i, 0)),
                      pl.BlockSpec((1, C), lambda i: (0, 0)),
                      pl.BlockSpec((1, C), lambda i: (0, 0))],
            out_specs=pl.BlockSpec((tm, C), lambda i: (i, 0)),
        ),
        compiler_params=_cparams("parallel"),
    )(x2, g.astype(jnp.float32).reshape(1, C), b.astype(jnp.float32).reshape(1, C))
    out = out if Mp == M else out[:M]
    return out.reshape(shape)


def _window_attn_kernel(q_ref, k_ref, v_ref, rpb_ref, mask_ref, o_ref, *,
                        scale, masked):
    """Gw whole windows x all heads per grid step; one batched dot_general each."""
    Gw, nH, N, d = q_ref.shape
    GH = Gw * nH
    q = (q_ref[...].astype(jnp.float32) * scale).astype(jnp.bfloat16)
    q = q.reshape(GH, N, d)                 # leading-dim reshape (no relayout)
    k = k_ref[...].reshape(GH, N, d)
    v = v_ref[...].reshape(GH, N, d)
    s = jax.lax.dot_general(q, k, (((2,), (2,)), ((0,), (0,))),
                            preferred_element_type=jnp.float32)   # (GH, N, N)
    s = s.reshape(Gw, nH, N, N) + rpb_ref[...][None]
    if masked:
        s = s + mask_ref[...][:, None, :, :]
    s = s - jnp.max(s, axis=-1, keepdims=True)
    p = jnp.exp(s)
    p = p * pl.reciprocal(jnp.sum(p, axis=-1, keepdims=True), approx=True)
    p = p.reshape(GH, N, N).astype(jnp.bfloat16)
    o = jax.lax.dot_general(p, v, (((2,), (1,)), ((0,), (0,))),
                            preferred_element_type=jnp.float32)   # (GH, N, d)
    o_ref[...] = o.reshape(Gw, nH, N, d).astype(o_ref.dtype)


def pallas_window_attention(q, k, v, rpb, mask, scale):
    """q,k,v: (B_, nH, N, d); rpb: (nH, N, N); mask: (nW, N, N) or None."""
    B_, nH, N, d = q.shape
    masked = mask is not None
    if mask is None:
        mask = jnp.zeros((1, N, N), jnp.float32)
    nW = mask.shape[0]
    Gw = _pick_group_attn(B_, nW, masked)
    Gm = Gw if (masked and nW > 1) else 1
    nblk_m = max(1, nW // Gm)
    qkv_spec = pl.BlockSpec((Gw, nH, N, d), lambda i: (i, 0, 0, 0))
    return pl.pallas_call(
        functools.partial(_window_attn_kernel, scale=scale, masked=masked),
        out_shape=jax.ShapeDtypeStruct((B_, nH, N, d), jnp.bfloat16),
        grid_spec=pltpu.PrefetchScalarGridSpec(
            num_scalar_prefetch=0,
            grid=(B_ // Gw,),
            in_specs=[qkv_spec, qkv_spec, qkv_spec,
                      pl.BlockSpec((nH, N, N), lambda i: (0, 0, 0)),
                      pl.BlockSpec((Gm, N, N),
                                   lambda i, nb=nblk_m: (i % nb, 0, 0))],
            out_specs=pl.BlockSpec((Gw, nH, N, d), lambda i: (i, 0, 0, 0)),
        ),
        compiler_params=_cparams("parallel"),
    )(q.astype(jnp.bfloat16), k.astype(jnp.bfloat16), v.astype(jnp.bfloat16),
      rpb.astype(jnp.float32), mask.astype(jnp.float32))


def _gap_kernel(x_ref, o_ref, acc_ref, *, inv_n):
    @pl.when(pl.program_id(1) == 0)
    def _():
        acc_ref[...] = jnp.zeros_like(acc_ref)
    acc_ref[...] += jnp.sum(x_ref[...].astype(jnp.float32), axis=1, keepdims=True)

    @pl.when(pl.program_id(1) == pl.num_programs(1) - 1)
    def _():
        o_ref[...] = (acc_ref[...] * inv_n).astype(o_ref.dtype)


def pallas_global_avgpool(x):
    """x: (B, HW, C) -> (B, C), tiled over HW with an f32 accumulator."""
    B, HW, C = x.shape
    x = x.astype(jnp.bfloat16)
    thw = HW if HW <= 2048 else 1024
    HWp = ((HW + thw - 1) // thw) * thw
    if HWp != HW:
        x = jnp.pad(x, ((0, 0), (0, HWp - HW), (0, 0)))    # zeros don't change sum
    out = pl.pallas_call(
        functools.partial(_gap_kernel, inv_n=1.0 / HW),
        out_shape=jax.ShapeDtypeStruct((B, 1, C), jnp.bfloat16),
        grid_spec=pltpu.PrefetchScalarGridSpec(
            num_scalar_prefetch=0,
            grid=(B, HWp // thw),
            in_specs=[pl.BlockSpec((1, thw, C), lambda b, j: (b, j, 0))],
            out_specs=pl.BlockSpec((1, 1, C), lambda b, j: (b, 0, 0)),
            scratch_shapes=[pltpu.VMEM((1, 1, C), jnp.float32)],
        ),
        compiler_params=_cparams("parallel", "arbitrary"),
    )(x)
    return out[:, 0, :]


def _dilated_conv3x3_kernel(x_ref, w_ref, b_ref, o_ref, *, H, W, dil):
    """9-tap accumulation over shifted slices of the padded image (no im2col)."""
    Cout = o_ref.shape[-1]
    acc = jnp.zeros((H * W, Cout), jnp.float32)
    for kh in range(3):
        for kw in range(3):
            tap = x_ref[0, kh * dil:kh * dil + H, kw * dil:kw * dil + W, :]
            tap = tap.reshape(H * W, tap.shape[-1]).astype(jnp.bfloat16)
            acc = acc + jnp.dot(tap, w_ref[kh * 3 + kw],
                                preferred_element_type=jnp.float32)
    acc = jnp.maximum(acc + b_ref[...], 0.0)          # fused (folded BN) + ReLU
    o_ref[0] = acc.reshape(H, W, Cout).astype(o_ref.dtype)


def dilated_conv3x3(x, w_taps, b, dil):
    """3x3 conv, stride 1, padding=dilation, fused BN+ReLU.  x NHWC, w (9,C,Cout)."""
    # TODO(synk): rank-3 (H,W,C)x(C,Cout) dot_general would avoid the per-tap
    #             reshape copies once verified against the Mosaic lowering.
    B, H, W, C = x.shape
    Cout = w_taps.shape[-1]
    xp = jnp.pad(x.astype(jnp.float32), ((0, 0), (dil, dil), (dil, dil), (0, 0)))
    Hp, Wp = H + 2 * dil, W + 2 * dil
    return pl.pallas_call(
        functools.partial(_dilated_conv3x3_kernel, H=H, W=W, dil=dil),
        out_shape=jax.ShapeDtypeStruct((B, H, W, Cout), jnp.bfloat16),
        grid_spec=pltpu.PrefetchScalarGridSpec(
            num_scalar_prefetch=0,
            grid=(B,),
            in_specs=[pl.BlockSpec((1, Hp, Wp, C), lambda i: (i, 0, 0, 0)),
                      pl.BlockSpec((9, C, Cout), lambda i: (0, 0, 0)),
                      pl.BlockSpec((1, Cout), lambda i: (0, 0))],
            out_specs=pl.BlockSpec((1, H, W, Cout), lambda i: (i, 0, 0, 0)),
        ),
        compiler_params=_cparams("parallel"),
    )(xp, w_taps.astype(jnp.bfloat16), b.astype(jnp.float32).reshape(1, Cout))


def _resize_rows_kernel(x_ref, r_ref, o_ref):
    # (Ho, H) @ (H, W*C) — contraction over H, output lane-dense in W*C.
    o_ref[0] = jnp.dot(r_ref[...], x_ref[0],
                       preferred_element_type=jnp.float32).astype(o_ref.dtype)


def _resize_cols_kernel(y_ref, r_ref, o_ref):
    # batched (Wo, W) @ (W, C) over the G group rows — channels stay on lanes.
    G = y_ref.shape[0]
    r = jnp.broadcast_to(r_ref[...][None], (G,) + r_ref.shape)
    o = jax.lax.dot_general(r, y_ref[...], (((2,), (1,)), ((0,), (0,))),
                            preferred_element_type=jnp.float32)
    o_ref[...] = o.astype(o_ref.dtype)


def _interp_matrix(n_in, n_out):
    # align_corners=True, matching F.interpolate(..., align_corners=True).
    m = np.zeros((n_out, n_in), np.float32)
    if n_in == 1 or n_out == 1:
        m[:, 0] = 1.0
        return jnp.asarray(m)
    scale = (n_in - 1) / (n_out - 1)
    for i in range(n_out):
        src = i * scale
        lo = min(int(np.floor(src)), n_in - 1)
        hi = min(lo + 1, n_in - 1)
        w = src - lo
        m[i, lo] += 1.0 - w
        m[i, hi] += w
    return jnp.asarray(m)


def bilinear_resize(x, Ho, Wo):
    """NHWC bilinear resize (align_corners=True); two channels-last kernels."""
    B, H, W, C = x.shape
    if (H, W) == (Ho, Wo):
        return x
    out_dtype = x.dtype
    xb = x.astype(jnp.bfloat16)
    Rh = _interp_matrix(H, Ho).astype(jnp.bfloat16)        # (Ho, H)
    Rw = _interp_matrix(W, Wo).astype(jnp.bfloat16)        # (Wo, W)

    xr = xb.reshape(B, H, W * C)                           # contiguous reshape
    yr = pl.pallas_call(
        _resize_rows_kernel,
        out_shape=jax.ShapeDtypeStruct((B, Ho, W * C), jnp.bfloat16),
        grid_spec=pltpu.PrefetchScalarGridSpec(
            num_scalar_prefetch=0,
            grid=(B,),
            in_specs=[pl.BlockSpec((1, H, W * C), lambda i: (i, 0, 0)),
                      pl.BlockSpec((Ho, H), lambda i: (0, 0))],
            out_specs=pl.BlockSpec((1, Ho, W * C), lambda i: (i, 0, 0)),
        ),
        compiler_params=_cparams("parallel"),
    )(xr, Rh)

    yc = yr.reshape(B * Ho, W, C)                          # contiguous reshape
    M = B * Ho
    G = _pick_group(M, cap=8, min_steps=2)
    out = pl.pallas_call(
        _resize_cols_kernel,
        out_shape=jax.ShapeDtypeStruct((M, Wo, C), out_dtype),
        grid_spec=pltpu.PrefetchScalarGridSpec(
            num_scalar_prefetch=0,
            grid=(M // G,),
            in_specs=[pl.BlockSpec((G, W, C), lambda i: (i, 0, 0)),
                      pl.BlockSpec((Wo, W), lambda i: (0, 0))],
            out_specs=pl.BlockSpec((G, Wo, C), lambda i: (i, 0, 0)),
        ),
        compiler_params=_cparams("parallel"),
    )(yc, Rw)
    return out.reshape(B, Ho, Wo, C)


def _cls_head_kernel(x_ref, w1_ref, b1_ref, w2_ref, b2_ref, o_ref):
    h = jnp.dot(x_ref[...], w1_ref[...], preferred_element_type=jnp.float32)
    h = jnp.maximum(h + b1_ref[...], 0.0)
    y = jnp.dot(h.astype(jnp.bfloat16), w2_ref[...],
                preferred_element_type=jnp.float32)
    o_ref[...] = (y + b2_ref[...]).astype(o_ref.dtype)


def classifier_head(x, w1, b1, w2, b2):
    """Fused conv1x1(256->64)+BN+ReLU -> conv1x1(64->classes), lane-padded output."""
    B, H, W, C = x.shape
    num_classes = w2.shape[1]
    N1 = w1.shape[1]
    Np = max(128, ((num_classes + 127) // 128) * 128)      # lane-dense store
    xf = x.reshape(B * H * W, C).astype(jnp.bfloat16)
    M = xf.shape[0]
    w1b = w1.astype(jnp.bfloat16)
    b1b = b1.astype(jnp.float32).reshape(1, N1)
    w2b = jnp.pad(w2.astype(jnp.bfloat16), ((0, 0), (0, Np - num_classes)))
    b2b = jnp.pad(b2.astype(jnp.float32), (0, Np - num_classes)).reshape(1, Np)
    tm, Mp = _pick_tile(M, 4 * (C + N1 + Np))
    if Mp != M:
        xf = jnp.pad(xf, ((0, Mp - M), (0, 0)))
    out = pl.pallas_call(
        _cls_head_kernel,
        out_shape=jax.ShapeDtypeStruct((Mp, Np), jnp.float32),
        grid_spec=pltpu.PrefetchScalarGridSpec(
            num_scalar_prefetch=0,
            grid=(Mp // tm,),
            in_specs=[pl.BlockSpec((tm, C), lambda i: (i, 0)),
                      pl.BlockSpec((C, N1), lambda i: (0, 0)),
                      pl.BlockSpec((1, N1), lambda i: (0, 0)),
                      pl.BlockSpec((N1, Np), lambda i: (0, 0)),
                      pl.BlockSpec((1, Np), lambda i: (0, 0))],
            out_specs=pl.BlockSpec((tm, Np), lambda i: (i, 0)),
        ),
        compiler_params=_cparams("parallel"),
    )(xf, w1b, b1b, w2b, b2b)
    out = out[:M, :num_classes]
    return out.reshape(B, H, W, num_classes)


# =============================================================================
# Swin Transformer backbone (glue in plain JAX, hot paths in Pallas)
# =============================================================================

def window_partition(x, ws):
    B, H, W, C = x.shape
    x = x.reshape(B, H // ws, ws, W // ws, ws, C)
    return x.transpose(0, 1, 3, 2, 4, 5).reshape(-1, ws, ws, C)


def window_reverse(win, ws, H, W):
    B = win.shape[0] // ((H // ws) * (W // ws))
    x = win.reshape(B, H // ws, W // ws, ws, ws, -1)
    return x.transpose(0, 1, 3, 2, 4, 5).reshape(B, H, W, -1)


def relative_position_index(ws):
    coords = np.stack(np.meshgrid(np.arange(ws), np.arange(ws), indexing="ij"))
    flat = coords.reshape(2, -1)
    rel = (flat[:, :, None] - flat[:, None, :]).transpose(1, 2, 0).astype(np.int64)
    rel[:, :, 0] += ws - 1
    rel[:, :, 1] += ws - 1
    rel[:, :, 0] *= 2 * ws - 1
    return rel.sum(-1)  # (ws*ws, ws*ws)


def compute_shift_attn_mask(Hp, Wp, ws, shift):
    img = np.zeros((Hp, Wp), np.float32)
    cnt = 0
    for h in (slice(0, Hp - ws), slice(Hp - ws, Hp - shift), slice(Hp - shift, Hp)):
        for w in (slice(0, Wp - ws), slice(Wp - ws, Wp - shift), slice(Wp - shift, Wp)):
            img[h, w] = cnt
            cnt += 1
    mw = img.reshape(Hp // ws, ws, Wp // ws, ws).transpose(0, 2, 1, 3)
    mw = mw.reshape(-1, ws * ws)
    am = mw[:, None, :] - mw[:, :, None]
    am = np.where(am != 0, -100.0, 0.0).astype(np.float32)
    return jnp.asarray(am)  # (nW, N, N)


def swin_block(x, H, W, p, num_heads, ws, shift, stage_mask):
    B, L, C = x.shape
    nH = num_heads
    d = C // nH
    N = ws * ws
    a = p["attn"]
    x2 = x.reshape(B * L, C)

    # fused LN1 + QKV (one matmul with the concatenated (C, 3C) weight)
    qkv = pallas_ln_matmul(x2, p["norm1_g"], p["norm1_b"], a["qkv_w"], a["qkv_b"])
    qkv = qkv.reshape(B, H, W, 3 * C)

    pad_b = (ws - H % ws) % ws
    pad_r = (ws - W % ws) % ws
    if pad_r:
        blk = jnp.broadcast_to(a["qkv_b"].astype(qkv.dtype), (B, H, pad_r, 3 * C))
        qkv = jnp.concatenate([qkv, blk], axis=2)        # pad tokens -> qkv bias rows
    if pad_b:
        blk = jnp.broadcast_to(a["qkv_b"].astype(qkv.dtype),
                               (B, pad_b, W + pad_r, 3 * C))
        qkv = jnp.concatenate([qkv, blk], axis=1)
    Hp, Wp = H + pad_b, W + pad_r

    if shift > 0:
        qkv = jnp.roll(qkv, shift=(-shift, -shift), axis=(1, 2))
        mask = stage_mask
    else:
        mask = None

    win = window_partition(qkv, ws)                      # (B_, ws, ws, 3C)
    B_ = win.shape[0]
    win = win.reshape(B_, N, 3, nH, d).transpose(2, 0, 3, 1, 4)   # (3,B_,nH,N,d)
    att = pallas_window_attention(win[0], win[1], win[2], a["rpb"], mask,
                                  d ** -0.5)             # (B_, nH, N, d)
    att = att.transpose(0, 2, 1, 3).reshape(B_, ws, ws, C)
    h = window_reverse(att, ws, Hp, Wp)
    if shift > 0:
        h = jnp.roll(h, shift=(shift, shift), axis=(1, 2))
    if pad_b or pad_r:
        h = h[:, :H, :W, :]

    # attention output projection with the residual fused in (drop_path = id)
    x2 = pallas_matmul(h.reshape(B * L, C), a["proj_w"], a["proj_b"], res=x2)
    # MLP: LN2 fused into fc1 (+GELU), residual fused into fc2
    y = pallas_ln_matmul(x2, p["norm2_g"], p["norm2_b"], p["fc1_w"], p["fc1_b"],
                         act="gelu")
    x2 = pallas_matmul(y, p["fc2_w"], p["fc2_b"], res=x2)
    return x2.reshape(B, L, C)


def patch_merging(x, H, W, p):
    B, L, C = x.shape
    h = x.reshape(B, H, W, C)
    if H % 2 == 1 or W % 2 == 1:
        h = jnp.pad(h, ((0, 0), (0, H % 2), (0, W % 2), (0, 0)))
    x0 = h[:, 0::2, 0::2, :]
    x1 = h[:, 1::2, 0::2, :]
    x2 = h[:, 0::2, 1::2, :]
    x3 = h[:, 1::2, 1::2, :]
    h = jnp.concatenate([x0, x1, x2, x3], axis=-1)
    Hh, Wh = h.shape[1], h.shape[2]
    # LN fused into the Linear(4C -> 2C, no bias) reduction
    h = pallas_ln_matmul(h.reshape(B * Hh * Wh, 4 * C), p["norm_g"], p["norm_b"],
                         p["red_w"])
    return h.reshape(B, Hh * Wh, 2 * C), Hh, Wh


def swin_forward(x_nchw, p):
    B, Cin, H0, W0 = x_nchw.shape
    ps = 4
    Ph, Pw = H0 // ps, W0 // ps
    # PatchEmbed: 4x4/stride-4 conv == non-overlapping patch matmul
    patches = x_nchw.reshape(B, Cin, Ph, ps, Pw, ps).transpose(0, 2, 4, 1, 3, 5)
    patches = patches.reshape(B * Ph * Pw, Cin * ps * ps)
    x = pallas_matmul(patches, p["patch_w"], p["patch_b"])
    x = pallas_layernorm(x, p["patch_norm_g"], p["patch_norm_b"])
    C0 = p["patch_w"].shape[1]
    x = x.reshape(B, Ph * Pw, C0)
    H, W = Ph, Pw

    depths, heads, ws = p["depths"], p["num_heads"], p["window_size"]
    outs = []
    for i in range(len(depths)):
        C = C0 * (2 ** i)
        Hp = -(-H // ws) * ws
        Wp = -(-W // ws) * ws
        shift = ws // 2
        stage_mask = compute_shift_attn_mask(Hp, Wp, ws, shift)
        layer = p["layers"][i]
        for dblk in range(depths[i]):
            blk_shift = 0 if dblk % 2 == 0 else shift
            x = swin_block(x, H, W, layer["blocks"][dblk], heads[i], ws,
                           blk_shift, stage_mask)
        xo = pallas_layernorm(x, p[f"outnorm{i}_g"], p[f"outnorm{i}_b"])
        outs.append(xo.reshape(B, H, W, C))              # NHWC stage output (bf16)
        if i < len(depths) - 1:
            x, H, W = patch_merging(x, H, W, layer["downsample"])
    return outs   # 1/4:96, 1/8:192, 1/16:384, 1/32:768


# =============================================================================
# Decoder pieces: ASPP, SE blocks, 1x1 convs
# =============================================================================

def conv1x1(x, w, b=None, act="none"):
    B, H, W, C = x.shape
    y = pallas_matmul(x.reshape(B * H * W, C), w, b, act=act)
    return y.reshape(B, H, W, w.shape[1])


def se_block(x, p):
    B, H, W, C = x.shape
    s = pallas_global_avgpool(x.reshape(B, H * W, C))
    s = pallas_matmul(s, p["fc1_w"], p["fc1_b"], act="relu")
    s = pallas_matmul(s, p["fc2_w"], p["fc2_b"], act="sigmoid")
    return x * s[:, None, None, :]


def aspp_forward(x, p):
    B, H, W, C = x.shape
    xf = x.reshape(B * H * W, C)
    branches = [pallas_matmul(xf, p["c1_w"], p["c1_b"], act="relu")]
    for key, dil in (("c2", 6), ("c3", 12), ("c4", 18)):
        y = dilated_conv3x3(x, p[key + "_w"], p[key + "_b"], dil)
        branches.append(y.reshape(B * H * W, -1))
    gp = pallas_global_avgpool(x.reshape(B, H * W, C))
    gp = pallas_matmul(gp, p["gp_w"], p["gp_b"], act="relu")
    gp = jnp.broadcast_to(gp[:, None, :], (B, H * W, gp.shape[-1]))
    branches.append(gp.reshape(B * H * W, -1))
    cat = jnp.concatenate(branches, axis=-1)
    out = pallas_matmul(cat, p["proj_w"], p["proj_b"], act="relu")
    return out.reshape(B, H, W, -1)


# =============================================================================
# Mynet forward
# =============================================================================

def mynet_forward(x_nchw, params):
    B, Cin, H, W = x_nchw.shape
    st1, st2, st3, st4 = swin_forward(x_nchw, params["st"])        # NHWC features

    high_4 = aspp_forward(st4, params["aspp"])                     # 256 @ 1/32

    high_3 = bilinear_resize(high_4, st3.shape[1], st3.shape[2])
    high_3 = jnp.concatenate([st3, high_3], axis=-1)               # 384+256 = 640
    high_3 = se_block(high_3, params["se1"])
    high_3 = conv1x1(high_3, params["conv1_w"], params["conv1_b"], act="relu")

    high_2 = bilinear_resize(high_3, st2.shape[1], st2.shape[2])
    high_2 = jnp.concatenate([st2, high_2], axis=-1)               # 192+256 = 448
    high_2 = se_block(high_2, params["se2"])
    high_2 = conv1x1(high_2, params["conv2_w"], params["conv2_b"], act="relu")

    high_1 = bilinear_resize(high_2, st1.shape[1], st1.shape[2])
    high_1 = jnp.concatenate([st1, high_1], axis=-1)               # 96+256 = 352
    high_1 = se_block(high_1, params["se3"])
    high_1 = conv1x1(high_1, params["conv3_w"], params["conv3_b"], act="relu")

    out = classifier_head(high_1, params["cls1_w"], params["cls1_b"],
                          params["cls2_w"], params["cls2_b"])      # fused head, f32
    out = bilinear_resize(out, H, W)
    return out.transpose(0, 3, 1, 2)                               # NCHW, like PyTorch


# =============================================================================
# Deterministic synthetic parameter init
# =============================================================================

class _Init:
    def __init__(self, key):
        self._key = key

    def normal(self, shape, std=0.02):
        self._key, k = jax.random.split(self._key)
        return jax.random.normal(k, shape, jnp.float32) * std


def init_params(key, in_channels=3, num_classes=7):
    rng = _Init(key)
    zeros = lambda *s: jnp.zeros(s, jnp.float32)
    ones = lambda *s: jnp.ones(s, jnp.float32)
    # BatchNorm (eval) with default running stats folded into the preceding conv.
    bn_scale = float(1.0 / np.sqrt(1.0 + 1e-5))

    embed_dim = 96
    depths = (2, 2, 6, 2)
    num_heads = (3, 6, 12, 24)
    ws = 8
    N = ws * ws
    rpi = jnp.asarray(relative_position_index(ws).reshape(-1), jnp.int32)

    st = {"depths": depths, "num_heads": num_heads, "window_size": ws,
          "patch_w": rng.normal((in_channels * 16, embed_dim)),
          "patch_b": zeros(embed_dim),
          "patch_norm_g": ones(embed_dim), "patch_norm_b": zeros(embed_dim)}
    layers = []
    for i in range(4):
        C = embed_dim * (2 ** i)
        nH = num_heads[i]
        blocks = []
        for _ in range(depths[i]):
            rpb_table = rng.normal(((2 * ws - 1) ** 2, nH))
            # rel-pos bias gather hoisted into parameter prep: (nH, N, N)
            rpb = rpb_table[rpi].reshape(N, N, nH).transpose(2, 0, 1)
            blocks.append({
                "norm1_g": ones(C), "norm1_b": zeros(C),
                "attn": {
                    # fused nn.Linear(C, 3C) qkv projection
                    "qkv_w": rng.normal((C, 3 * C)), "qkv_b": zeros(3 * C),
                    "proj_w": rng.normal((C, C)), "proj_b": zeros(C),
                    "rpb": rpb,
                },
                "norm2_g": ones(C), "norm2_b": zeros(C),
                "fc1_w": rng.normal((C, 4 * C)), "fc1_b": zeros(4 * C),
                "fc2_w": rng.normal((4 * C, C)), "fc2_b": zeros(C),
            })
        layer = {"blocks": blocks}
        if i < 3:
            layer["downsample"] = {"norm_g": ones(4 * C), "norm_b": zeros(4 * C),
                                   "red_w": rng.normal((4 * C, 2 * C))}
        layers.append(layer)
        st[f"outnorm{i}_g"] = ones(C)
        st[f"outnorm{i}_b"] = zeros(C)
    st["layers"] = layers

    aspp = {
        "c1_w": rng.normal((768, 256)) * bn_scale, "c1_b": zeros(256),
        # dilated 3x3 convs stored per-tap: (9, Cin, Cout), tap index = kh*3+kw
        "c2_w": rng.normal((9, 768, 256)) * bn_scale, "c2_b": zeros(256),
        "c3_w": rng.normal((9, 768, 256)) * bn_scale, "c3_b": zeros(256),
        "c4_w": rng.normal((9, 768, 256)) * bn_scale, "c4_b": zeros(256),
        "gp_w": rng.normal((768, 256)) * bn_scale, "gp_b": zeros(256),
        "proj_w": rng.normal((5 * 256, 256)) * bn_scale, "proj_b": zeros(256),
    }

    def se_params(C, r=16):
        return {"fc1_w": rng.normal((C, C // r)), "fc1_b": zeros(C // r),
                "fc2_w": rng.normal((C // r, C)), "fc2_b": zeros(C)}

    return {
        "st": st,
        "aspp": aspp,
        "se1": se_params(640), "se2": se_params(448), "se3": se_params(352),
        "conv1_w": rng.normal((640, 256)) * bn_scale, "conv1_b": zeros(256),
        "conv2_w": rng.normal((448, 256)) * bn_scale, "conv2_b": zeros(256),
        "conv3_w": rng.normal((352, 256)) * bn_scale, "conv3_b": zeros(256),
        "cls1_w": rng.normal((256, 64)) * bn_scale, "cls1_b": zeros(64),
        "cls2_w": rng.normal((64, num_classes)), "cls2_b": zeros(num_classes),
    }


# =============================================================================
# Main
# =============================================================================

if __name__ == "__main__":
    num_classes = 7
    key = jax.random.PRNGKey(0)
    k_param, k_input = jax.random.split(key)
    params = init_params(k_param, in_channels=3, num_classes=num_classes)

    # Small input: B=2, C=3, 64x64 (divisible by patch 4 and by 32 for the pyramid).
    x = jax.random.normal(k_input, (2, 3, 64, 64), jnp.float32)

    out = mynet_forward(x, params)
    out = jax.block_until_ready(out)

    assert out.shape == (2, num_classes, 64, 64), out.shape
    assert bool(jnp.all(jnp.isfinite(out)))
    print("KERNEL_OK")
</pallas_src>

<mosaic_0001>
module attributes {stable_mosaic.version = 11 : i64} {
  func.func @_mm_kernel(%arg0: i32, %arg1: memref<256x48xbf16, #tpu.memory_space<vmem>>, %arg2: memref<48x96xbf16, #tpu.memory_space<vmem>>, %arg3: memref<1x96xf32, #tpu.memory_space<vmem>>, %arg4: memref<256x96xbf16, #tpu.memory_space<vmem>>) attributes {dimension_semantics = [#tpu.dimension_semantics<parallel>], iteration_bounds = array<i64: 2>, scalar_prefetch = 0 : i64, scratch_operands = 0 : i64, tpu.core_type = #tpu.core_type<tc>, window_params = [{transform_indices = @transform_0, window_bounds = array<i64: 256, 48>}, {pipeline_mode = #tpu.pipeline_mode<synchronous>, transform_indices = @transform_1, window_bounds = array<i64: 48, 96>}, {pipeline_mode = #tpu.pipeline_mode<synchronous>, transform_indices = @transform_2, window_bounds = array<i64: 1, 96>}, {transform_indices = @transform_3, window_bounds = array<i64: 256, 96>}]} {
    %c0 = arith.constant 0 : index
    %c0_0 = arith.constant 0 : index
    %0 = vector.load %arg1[%c0, %c0_0] : memref<256x48xbf16, #tpu.memory_space<vmem>>, vector<256x48xbf16>
    %c0_1 = arith.constant 0 : index
    %c0_2 = arith.constant 0 : index
    %1 = vector.load %arg2[%c0_1, %c0_2] : memref<48x96xbf16, #tpu.memory_space<vmem>>, vector<48x96xbf16>
    %cst = arith.constant dense<0.000000e+00> : vector<256x96xf32>
    %2 = tpu.matmul %0, %1, %cst {dimension_numbers = #tpu.dot_dimension_numbers<[1], [0], [0], [1], [0, 0, 1, 1], [], []>} : vector<256x48xbf16>, vector<48x96xbf16>, vector<256x96xf32> -> vector<256x96xf32>
    %c0_3 = arith.constant 0 : index
    %c0_4 = arith.constant 0 : index
    %3 = vector.load %arg3[%c0_3, %c0_4] : memref<1x96xf32, #tpu.memory_space<vmem>>, vector<1x96xf32>
    %4 = vector.broadcast %3 : vector<1x96xf32> to vector<256x96xf32>
    %5 = arith.addf %2, %4 : vector<256x96xf32>
    %6 = arith.truncf %5 : vector<256x96xf32> to vector<256x96xbf16>
    %c0_5 = arith.constant 0 : index
    %c0_6 = arith.constant 0 : index
    %7 = vector.load %arg4[%c0_5, %c0_6] : memref<256x96xbf16, #tpu.memory_space<vmem>>, vector<256x96xbf16>
    tpu.vector_store %arg4[%c0_5, %c0_6], %6 {strides = array<i32>} : memref<256x96xbf16, #tpu.memory_space<vmem>>, vector<256x96xbf16>,
    return
  }
  func.func @transform_0(%arg0: i32) -> (i32, i32) {
    %c0_i32 = arith.constant 0 : i32
    %c0_i32_0 = arith.constant 0 : i32
    return %arg0, %c0_i32 : i32, i32
  }
  func.func @transform_1(%arg0: i32) -> (i32, i32) {
    %c0_i32 = arith.constant 0 : i32
    %c0_i32_0 = arith.constant 0 : i32
    %c0_i32_1 = arith.constant 0 : i32
    return %c0_i32, %c0_i32_0 : i32, i32
  }
  func.func @transform_2(%arg0: i32) -> (i32, i32) {
    %c0_i32 = arith.constant 0 : i32
    %c0_i32_0 = arith.constant 0 : i32
    %c0_i32_1 = arith.constant 0 : i32
    return %c0_i32, %c0_i32_0 : i32, i32
  }
  func.func @transform_3(%arg0: i32) -> (i32, i32) {
    %c0_i32 = arith.constant 0 : i32
    %c0_i32_0 = arith.constant 0 : i32
    return %arg0, %c0_i32 : i32, i32
  }
}

</mosaic_0001>

<llo_original>
// kernel: tpu_custom_call.1
$region0: #{tpu_custom_call.1}
  #allocation0 [shape = 'u32[]', space=smem, size = 0x4, offset = 0x4, fixed_abs, tag = 'smem constant byte address 0x4 - core index']
  #allocation1 [shape = 'u32[72,128]{1,0:T(1,128)}', space=vmem, size = 0x9000, scoped, tag = 'internal scratch']
  %s0 = inlined_call_operand.vmem [shape: bf16[512,48], index: 0, kind: input, shape index: {}]
  %s1 = inlined_call_operand.vmem [shape: bf16[48,96], index: 1, kind: input, shape index: {}]
  %s2 = inlined_call_operand.vmem [shape: f32[1,96], index: 2, kind: input, shape index: {}]
  %s3 = inlined_call_operand.vmem [shape: bf16[512,96], index: 3, kind: output, shape index: {}]
  %s4 = sld [smem:[#allocation0]]
  $region45: #{tpu_custom_call.1} parent=0
    _
  %s6 = ssub.s32 1, %s4
  %s7 = scalar_select 0, %s6, %s4
  loop: start=0, step=1, limit=4
  $region2: #{tpu_custom_call.1} parent=0 // loop_pre_header
    _
  $region3: #{tpu_custom_call.1} parent=0 // loop_header
    %s9 = sphi 0, %s13
    %p10 = scmp.ge.s32.totalorder %s9, 4
    %s19 = sphi 0, %s21
    %s22 = sphi 0, %s19
    %s23 = sphi 0, %s22
    %s39 = sphi 0, %s23
    %s43 = sphi 0, %s43
    %s45 = sphi 0, %s43
    %s46 = sphi 0, %s45
    %s60 = sphi 0, %s46
    %s64 = sphi 0, %s64
    %s66 = sphi 0, %s64
    %s67 = sphi 0, %s66
    %s81 = sphi 0, %s67
    %s87 = sphi 0, %s89
    %s90 = sphi 0, %s87
    %s91 = sphi 0, %s90
    %s107 = sphi 0, %s91
  $region4: #{tpu_custom_call.1} parent=0 // loop_header_branch
    %12 = sbr.rel (%p10) target = $region8
  $region5: #{tpu_custom_call.1} parent=0 // loop_body
    %s14 = ssub.s32 %s9, 1
    %s15 = ssub.s32 %s9, 2
    %s16 = sadd.s32 %s9, 1
    %s17 = ssub.s32 %s9, %s16
    %p18 = scmp.eq.s32.totalorder %s17, 0
    %s20 = sadd.s32 %s19, 1
    %s21 = scalar_select %p18, %s19, %s20
    %p24 = pneg %p18
    %p25 = scmp.eq.s32.totalorder %s9, 1
    %p26 = por %p24, %p25
    %p27 = scmp.ne.s32.totalorder %s19, %s22
    %p28 = scmp.eq.s32.totalorder %s9, 0
    %p29 = por %p27, %p28
    %p30 = scmp.ne.s32.totalorder %s19, %s22
    %p31 = scmp.eq.s32.totalorder %s14, 1
    %p32 = por %p30, %p31
    %p33 = scmp.ne.s32.totalorder %s22, %s23
    %p34 = scmp.eq.s32.totalorder %s14, 0
    %p35 = por %p33, %p34
    %p36 = scmp.ne.s32.totalorder %s22, %s23
    %p37 = scmp.eq.s32.totalorder %s15, 1
    %p38 = por %p36, %p37
    %p40 = scmp.ne.s32.totalorder %s23, %s39
    %p41 = scmp.eq.s32.totalorder %s15, 0
    %p42 = por %p40, %p41
    %s44 = sadd.s32 %s43, 1
    %p47 = scmp.eq.s32.totalorder %s9, 1
    %p48 = scmp.ne.s32.totalorder %s43, %s45
    %p49 = scmp.eq.s32.totalorder %s9, 0
    %p50 = por %p48, %p49
    %p51 = scmp.ne.s32.totalorder %s43, %s45
    %p52 = scmp.eq.s32.totalorder %s14, 1
    %p53 = por %p51, %p52
    %p54 = scmp.ne.s32.totalorder %s45, %s46
    %p55 = scmp.eq.s32.totalorder %s14, 0
    %p56 = por %p54, %p55
    %p57 = scmp.ne.s32.totalorder %s45, %s46
    %p58 = scmp.eq.s32.totalorder %s15, 1
    %p59 = por %p57, %p58
    %p61 = scmp.ne.s32.totalorder %s46, %s60
    %p62 = scmp.eq.s32.totalorder %s15, 0
    %p63 = por %p61, %p62
    %s65 = sadd.s32 %s64, 1
    %p68 = scmp.eq.s32.totalorder %s9, 1
    %p69 = scmp.ne.s32.totalorder %s64, %s66
    %p70 = scmp.eq.s32.totalorder %s9, 0
    %p71 = por %p69, %p70
    %p72 = scmp.ne.s32.totalorder %s64, %s66
    %p73 = scmp.eq.s32.totalorder %s14, 1
    %p74 = por %p72, %p73
    %p75 = scmp.ne.s32.totalorder %s66, %s67
    %p76 = scmp.eq.s32.totalorder %s14, 0
    %p77 = por %p75, %p76
    %p78 = scmp.ne.s32.totalorder %s66, %s67
    %p79 = scmp.eq.s32.totalorder %s15, 1
    %p80 = por %p78, %p79
    %p82 = scmp.ne.s32.totalorder %s67, %s81
    %p83 = scmp.eq.s32.totalorder %s15, 0
    %p84 = por %p82, %p83
    %s85 = ssub.s32 %s9, %s16
    %p86 = scmp.eq.s32.totalorder %s85, 0
    %s88 = sadd.s32 %s87, 1
    %s89 = scalar_select %p86, %s87, %s88
    %p92 = pneg %p86
    %p93 = scmp.eq.s32.totalorder %s9, 1
    %p94 = por %p92, %p93
    %p95 = scmp.ne.s32.totalorder %s87, %s90
    %p96 = scmp.eq.s32.totalorder %s9, 0
    %p97 = por %p95, %p96
    %p98 = scmp.ne.s32.totalorder %s87, %s90
    %p99 = scmp.eq.s32.totalorder %s14, 1
    %p100 = por %p98, %p99
    %p101 = scmp.ne.s32.totalorder %s90, %s91
    %p102 = scmp.eq.s32.totalorder %s14, 0
    %p103 = por %p101, %p102
    %p104 = scmp.ne.s32.totalorder %s90, %s91
    %p105 = scmp.eq.s32.totalorder %s15, 1
    %p106 = por %p104, %p105
    %p108 = scmp.ne.s32.totalorder %s91, %s107
    %p109 = scmp.eq.s32.totalorder %s15, 0
    %p110 = por %p108, %p109
    %p111 = scmp.le.s32.totalorder 1, %s9
    %p112 = scmp.lt.s32.totalorder %s9, 3
    %p113 = pnand %p111, %p112
    %p114 = pneg %p113
    // Predicated region
    $region9: #{tpu_custom_call.1} parent=5 // pred_check
      _
    $region10: #{tpu_custom_call.1} parent=5 // pred_check_branch
      %116 = sbr.rel (%p113) target = $region12
    $region11: #{tpu_custom_call.1} parent=5 // pred_region
      %s117 = ssub.s32 %s9, 1
      // Predicated region
      $region13: #{tpu_custom_call.1} parent=11 // pred_check
        %p118 = pneg %p56
      $region14: #{tpu_custom_call.1} parent=11 // pred_check_branch
        %120 = sbr.rel (%p118) target = $region16
      $region15: #{tpu_custom_call.1} parent=11 // pred_region
        _
      $region16: #{tpu_custom_call.1} parent=11 // pred_fallthru
        _
      // Predicated region
      $region17: #{tpu_custom_call.1} parent=11 // pred_check
        %p121 = pneg %p77
      $region18: #{tpu_custom_call.1} parent=11 // pred_check_branch
        %123 = sbr.rel (%p121) target = $region20
      $region19: #{tpu_custom_call.1} parent=11 // pred_region
        _
      $region20: #{tpu_custom_call.1} parent=11 // pred_fallthru
        _
    $region12: #{tpu_custom_call.1} parent=5 // pred_fallthru
      _
    %p124 = scmp.lt.s32.totalorder %s9, 2
    // Predicated region
    $region21: #{tpu_custom_call.1} parent=5 // pred_check
      %p125 = pneg %p124
    $region22: #{tpu_custom_call.1} parent=5 // pred_check_branch
      %127 = sbr.rel (%p125) target = $region24
    $region23: #{tpu_custom_call.1} parent=5 // pred_region
      // Predicated region
      $region25: #{tpu_custom_call.1} parent=23 // pred_check
        %p128 = pneg %p29
      $region26: #{tpu_custom_call.1} parent=23 // pred_check_branch
        %130 = sbr.rel (%p128) target = $region28
      $region27: #{tpu_custom_call.1} parent=23 // pred_region
        %s131 = smul.u32 32, %s9
        %p132 = scmp.lt.s32.totalorder %s131, 63
        %s133 = scalar_select %p132, %s131, 63
        %s134 = smul.addr %s133, 4
        %s135 = scalar_lea.vmem %s0, %s134
        %s136 = smul.u32 32, %s9
      $region28: #{tpu_custom_call.1} parent=23 // pred_fallthru
        _
    $region24: #{tpu_custom_call.1} parent=5 // pred_fallthru
      _
    %p137 = scmp.le.s32.totalorder 1, %s9
    %p138 = scmp.lt.s32.totalorder %s9, 3
    %p139 = pnand %p137, %p138
    %p140 = pneg %p139
    // Predicated region
    $region29: #{tpu_custom_call.1} parent=5 // pred_check
      _
    $region30: #{tpu_custom_call.1} parent=5 // pred_check_branch
      %142 = sbr.rel (%p139) target = $region32
    $region31: #{tpu_custom_call.1} parent=5 // pred_region
      %s143 = ssub.s32 %s9, 1
      %s144 = smul.u32 32, %s14
      %p145 = scmp.lt.s32.totalorder %s144, 63
      %s146 = scalar_select %p145, %s144, 63
      %s147 = smul.addr %s146, 4
      %s148 = scalar_lea.vmem %s0, %s147
      %p149 = pneg %p35
      %p150 = pneg %p32
      %p151 = pneg %p56
      %p152 = pneg %p53
      %p153 = pneg %p77
      %p154 = pneg %p74
      %p155 = pneg %p103
      %p156 = pneg %p100
      %s157 = smul.u32 32, %s14
      %p158 = scmp.lt.s32.totalorder %s157, 63
      %s159 = scalar_select %p158, %s157, 63
      %s160 = smul.addr %s159, 4
      %s161 = scalar_lea.vmem %s3, %s160
      %s162 = smul.u32 32, %s14
      %p163 = scmp.lt.s32.totalorder %s162, 63
      %s164 = scalar_select %p163, %s162, 63
      %s165 = smul.addr %s164, 4
      %s166 = scalar_lea.vmem %s0, %s165
      %s167 = smul.u32 32, %s14
      %s168 = smul.u32 32, %s14
      %p169 = scmp.lt.s32.totalorder %s168, 63
      %s170 = scalar_select %p169, %s168, 63
      %s171 = smul.addr %s170, 4
      %s172 = scalar_lea.vmem %s3, %s171
      %s173 = smul.u32 32, %s14
      %v175 = vld [vmem:[%s166] sm:$0xf]
      %v176 = vld [vmem:[%s166 + $0x4] sm:$0xf]
      %v177 = vld [vmem:[%s166 + $0x8] sm:$0xf]
      %v178 = vld [vmem:[%s166 + $0xc] sm:$0xf]
      %v179 = vld [vmem:[%s166 + $0x10] sm:$0xf]
      %v180 = vld [vmem:[%s166 + $0x14] sm:$0xf]
      %v181 = vld [vmem:[%s166 + $0x18] sm:$0xf]
      %v182 = vld [vmem:[%s166 + $0x1c] sm:$0xf]
      %v183 = vld [vmem:[%s166 + $0x20] sm:$0xf]
      %v184 = vld [vmem:[%s166 + $0x24] sm:$0xf]
      %v185 = vld [vmem:[%s166 + $0x28] sm:$0xf]
      %v186 = vld [vmem:[%s166 + $0x2c] sm:$0xf]
      %v187 = vld [vmem:[%s166 + $0x30] sm:$0xf]
      %v188 = vld [vmem:[%s166 + $0x34] sm:$0xf]
      %v189 = vld [vmem:[%s166 + $0x38] sm:$0xf]
      %v190 = vld [vmem:[%s166 + $0x3c] sm:$0xf]
      %v191 = vld [vmem:[%s166 + $0x40] sm:$0xf]
      %v192 = vld [vmem:[%s166 + $0x44] sm:$0xf]
      %v193 = vld [vmem:[%s166 + $0x48] sm:$0xf]
      %v194 = vld [vmem:[%s166 + $0x4c] sm:$0xf]
      %v195 = vld [vmem:[%s166 + $0x50] sm:$0xf]
      %v196 = vld [vmem:[%s166 + $0x54] sm:$0xf]
      %v197 = vld [vmem:[%s166 + $0x58] sm:$0xf]
      %v198 = vld [vmem:[%s166 + $0x5c] sm:$0xf]
      %v199 = vld [vmem:[%s166 + $0x60] sm:$0xf]
      %v200 = vld [vmem:[%s166 + $0x64] sm:$0xf]
      %v201 = vld [vmem:[%s166 + $0x68] sm:$0xf]
      %v202 = vld [vmem:[%s166 + $0x6c] sm:$0xf]
      %v203 = vld [vmem:[%s166 + $0x70] sm:$0xf]
      %v204 = vld [vmem:[%s166 + $0x74] sm:$0xf]
      %v205 = vld [vmem:[%s166 + $0x78] sm:$0xf]
      %v206 = vld [vmem:[%s166 + $0x7c] sm:$0xf]
      %v207 = vld [vmem:[%s1] sm:$0xf]
      %v208 = vld [vmem:[%s1 + $0x4] sm:$0xf]
      %v209 = vld [vmem:[%s1 + $0x8] sm:$0xf]
      %v210 = vld [vmem:[%s1 + $0xc] sm:$0xf]
      %v211 = vld [vmem:[%s1 + $0x10] sm:$0xf]
      %v212 = vld [vmem:[%s1 + $0x14] sm:$0xf]
      %v213 = vld [vmem:[%s2] sm:$0x1]
      %v215 = vperm.slane %v213, 0
      %v249 = vunpack.c.l.b16 %v175
      %v250 = vunpack.c.l.b16 %v176
      %v251 = vunpack.c.l.b16 %v177
      %v252 = vunpack.c.l.b16 %v178
      %v253 = vunpack.c.l.b16 %v179
      %v254 = vunpack.c.l.b16 %v180
      %v255 = vunpack.c.l.b16 %v181
      %v256 = vunpack.c.l.b16 %v182
      %v257 = vunpack.c.l.b16 %v183
      %v258 = vunpack.c.l.b16 %v184
      %v259 = vunpack.c.l.b16 %v185
      %v260 = vunpack.c.l.b16 %v186
      %v261 = vunpack.c.l.b16 %v187
      %v262 = vunpack.c.l.b16 %v188
      %v263 = vunpack.c.l.b16 %v189
      %v264 = vunpack.c.l.b16 %v190
      %v265 = vunpack.c.l.b16 %v191
      %v266 = vunpack.c.l.b16 %v192
      %v267 = vunpack.c.l.b16 %v193
      %v268 = vunpack.c.l.b16 %v194
      %v269 = vunpack.c.l.b16 %v195
      %v270 = vunpack.c.l.b16 %v196
      %v271 = vunpack.c.l.b16 %v197
      %v272 = vunpack.c.l.b16 %v198
      %v273 = vunpack.c.l.b16 %v199
      %v274 = vunpack.c.l.b16 %v200
      %v275 = vunpack.c.l.b16 %v201
      %v276 = vunpack.c.l.b16 %v202
      %v277 = vunpack.c.l.b16 %v203
      %v278 = vunpack.c.l.b16 %v204
      %v279 = vunpack.c.l.b16 %v205
      %v280 = vunpack.c.l.b16 %v206
      %v281 = vpack.c.b16 %v250, %v249
      %v282 = vpack.c.b16 %v252, %v251
      %v283 = vpack.c.b16 %v254, %v253
      %v284 = vpack.c.b16 %v256, %v255
      %v285 = vpack.c.b16 %v258, %v257
      %v286 = vpack.c.b16 %v260, %v259
      %v287 = vpack.c.b16 %v262, %v261
      %v288 = vpack.c.b16 %v264, %v263
      %v289 = vpack.c.b16 %v266, %v265
      %v290 = vpack.c.b16 %v268, %v267
      %v291 = vpack.c.b16 %v270, %v269
      %v292 = vpack.c.b16 %v272, %v271
      %v293 = vpack.c.b16 %v274, %v273
      %v294 = vpack.c.b16 %v276, %v275
      %v295 = vpack.c.b16 %v278, %v277
      %v296 = vpack.c.b16 %v280, %v279
      %v303 = vunpack.c.l.b16 %v207
      %v304 = vunpack.c.l.b16 %v208
      %v305 = vunpack.c.l.b16 %v209
      %v306 = vunpack.c.l.b16 %v210
      %v307 = vunpack.c.l.b16 %v211
      %v308 = vunpack.c.l.b16 %v212
      %v309 = vpack.c.b16 %v304, %v303
      %v310 = vpack.c.b16 %v306, %v305
      %v311 = vpack.c.b16 %v308, %v307
      %vm315 = vcmask 392192
      %v317 = vsel %vm315, %v281, 0
      %v320 = vsel %vm315, %v282, 0
      %v323 = vsel %vm315, %v283, 0
      %v326 = vsel %vm315, %v284, 0
      %v329 = vsel %vm315, %v285, 0
      %v332 = vsel %vm315, %v286, 0
      %v335 = vsel %vm315, %v287, 0
      %v338 = vsel %vm315, %v288, 0
      %v341 = vsel %vm315, %v289, 0
      %v344 = vsel %vm315, %v290, 0
      %v347 = vsel %vm315, %v291, 0
      %v350 = vsel %vm315, %v292, 0
      %v353 = vsel %vm315, %v293, 0
      %v356 = vsel %vm315, %v294, 0
      %v359 = vsel %vm315, %v295, 0
      %v362 = vsel %vm315, %v296, 0
      %364 = vmatpush.bf16.msra.mxu0 0
      %365 = vmatpush.bf16.msra.mxu0 0
      %366 = vmatpush.bf16.msra.mxu0 0
      %367 = vmatpush.bf16.msra.mxu0 0
      %368 = vmatpush.bf16.msra.mxu0 0
      %369 = vmatpush.bf16.msra.mxu0 %v311
      %370 = vmatpush.bf16.msra.mxu0 %v310
      %371 = vmatpush.bf16.msra.mxu0 %v309
      %372 = vmatmul.bf16.gmra.mxu0 %v317
      %v373 = vpop.f32.mrf.mxu0
      %v374 = vadd.f32 %v215, %v373
      %v375 = vpop.f32.mrf.mxu0
      %v376 = vadd.f32 %v215, %v375
      %377 = vmatmul.bf16.gmra.mxu0 %v320
      %v378 = vpop.f32.mrf.mxu0
      %v379 = vadd.f32 %v215, %v378
      %v380 = vpop.f32.mrf.mxu0
      %v381 = vadd.f32 %v215, %v380
      %382 = vmatmul.bf16.gmra.mxu0 %v323
      %v383 = vpop.f32.mrf.mxu0
      %v384 = vadd.f32 %v215, %v383
      %v385 = vpop.f32.mrf.mxu0
      %v386 = vadd.f32 %v215, %v385
      %387 = vmatmul.bf16.gmra.mxu0 %v326
      %v388 = vpop.f32.mrf.mxu0
      %v389 = vadd.f32 %v215, %v388
      %v390 = vpop.f32.mrf.mxu0
      %v391 = vadd.f32 %v215, %v390
      %392 = vmatmul.bf16.gmra.mxu0 %v329
      %v393 = vpop.f32.mrf.mxu0
      %v394 = vadd.f32 %v215, %v393
      %v395 = vpop.f32.mrf.mxu0
      %v396 = vadd.f32 %v215, %v395
      %397 = vmatmul.bf16.gmra.mxu0 %v332
      %v398 = vpop.f32.mrf.mxu0
      %v399 = vadd.f32 %v215, %v398
      %v400 = vpop.f32.mrf.mxu0
      %v401 = vadd.f32 %v215, %v400
      %402 = vmatmul.bf16.gmra.mxu0 %v335
      %v403 = vpop.f32.mrf.mxu0
      %v404 = vadd.f32 %v215, %v403
      %v405 = vpop.f32.mrf.mxu0
      %v406 = vadd.f32 %v215, %v405
      %407 = vmatmul.bf16.gmra.mxu0 %v338
      %v408 = vpop.f32.mrf.mxu0
      %v409 = vadd.f32 %v215, %v408
      %v410 = vpop.f32.mrf.mxu0
      %v411 = vadd.f32 %v215, %v410
      %412 = vmatmul.bf16.gmra.mxu0 %v341
      %v413 = vpop.f32.mrf.mxu0
      %v414 = vadd.f32 %v215, %v413
      %v415 = vpop.f32.mrf.mxu0
      %v416 = vadd.f32 %v215, %v415
      %417 = vmatmul.bf16.gmra.mxu0 %v344
      %v418 = vpop.f32.mrf.mxu0
      %v419 = vadd.f32 %v215, %v418
      %v420 = vpop.f32.mrf.mxu0
      %v421 = vadd.f32 %v215, %v420
      %422 = vmatmul.bf16.gmra.mxu0 %v347
      %v423 = vpop.f32.mrf.mxu0
      %v424 = vadd.f32 %v215, %v423
      %v425 = vpop.f32.mrf.mxu0
      %v426 = vadd.f32 %v215, %v425
      %427 = vmatmul.bf16.gmra.mxu0 %v350
      %v428 = vpop.f32.mrf.mxu0
      %v429 = vadd.f32 %v215, %v428
      %v430 = vpop.f32.mrf.mxu0
      %v431 = vadd.f32 %v215, %v430
      %432 = vmatmul.bf16.gmra.mxu0 %v353
      %v433 = vpop.f32.mrf.mxu0
      %v434 = vadd.f32 %v215, %v433
      %v435 = vpop.f32.mrf.mxu0
      %v436 = vadd.f32 %v215, %v435
      %437 = vmatmul.bf16.gmra.mxu0 %v356
      %v438 = vpop.f32.mrf.mxu0
      %v439 = vadd.f32 %v215, %v438
      %v440 = vpop.f32.mrf.mxu0
      %v441 = vadd.f32 %v215, %v440
      %442 = vmatmul.bf16.gmra.mxu0 %v359
      %v443 = vpop.f32.mrf.mxu0
      %v444 = vadd.f32 %v215, %v443
      %v445 = vpop.f32.mrf.mxu0
      %v446 = vadd.f32 %v215, %v445
      %447 = vmatmul.bf16.gmra.mxu0 %v362
      %v448 = vpop.f32.mrf.mxu0
      %v449 = vadd.f32 %v215, %v448
      %v450 = vpop.f32.mrf.mxu0
      %v451 = vadd.f32 %v215, %v450
      %452 = vdwg.mxu0
      %v453 = vpack.c.bf16 %v374, %v374
      %v454 = vpack.c.bf16 %v376, %v376
      %v455 = vpack.c.bf16 %v379, %v379
      %v456 = vpack.c.bf16 %v381, %v381
      %v457 = vpack.c.bf16 %v384, %v384
      %v458 = vpack.c.bf16 %v386, %v386
      %v459 = vpack.c.bf16 %v389, %v389
      %v460 = vpack.c.bf16 %v391, %v391
      %v461 = vpack.c.bf16 %v394, %v394
      %v462 = vpack.c.bf16 %v396, %v396
      %v463 = vpack.c.bf16 %v399, %v399
      %v464 = vpack.c.bf16 %v401, %v401
      %v465 = vpack.c.bf16 %v404, %v404
      %v466 = vpack.c.bf16 %v406, %v406
      %v467 = vpack.c.bf16 %v409, %v409
      %v468 = vpack.c.bf16 %v411, %v411
      %v469 = vpack.c.bf16 %v414, %v414
      %v470 = vpack.c.bf16 %v416, %v416
      %v471 = vpack.c.bf16 %v419, %v419
      %v472 = vpack.c.bf16 %v421, %v421
      %v473 = vpack.c.bf16 %v424, %v424
      %v474 = vpack.c.bf16 %v426, %v426
      %v475 = vpack.c.bf16 %v429, %v429
      %v476 = vpack.c.bf16 %v431, %v431
      %v477 = vpack.c.bf16 %v434, %v434
      %v478 = vpack.c.bf16 %v436, %v436
      %v479 = vpack.c.bf16 %v439, %v439
      %v480 = vpack.c.bf16 %v441, %v441
      %v481 = vpack.c.bf16 %v444, %v444
      %v482 = vpack.c.bf16 %v446, %v446
      %v483 = vpack.c.bf16 %v449, %v449
      %v484 = vpack.c.bf16 %v451, %v451
      %vm485 = vcmask 781312
      %486 = vst.msk [vmem:[%s172] sm:$0xf] %vm485, %v453
      %487 = vst.msk [vmem:[%s172 + $0x4] sm:$0xf] %vm485, %v454
      %488 = vst.msk [vmem:[%s172 + $0x8] sm:$0xf] %vm485, %v455
      %489 = vst.msk [vmem:[%s172 + $0xc] sm:$0xf] %vm485, %v456
      %490 = vst.msk [vmem:[%s172 + $0x10] sm:$0xf] %vm485, %v457
      %491 = vst.msk [vmem:[%s172 + $0x14] sm:$0xf] %vm485, %v458
      %492 = vst.msk [vmem:[%s172 + $0x18] sm:$0xf] %vm485, %v459
      %493 = vst.msk [vmem:[%s172 + $0x1c] sm:$0xf] %vm485, %v460
      %494 = vst.msk [vmem:[%s172 + $0x20] sm:$0xf] %vm485, %v461
      %495 = vst.msk [vmem:[%s172 + $0x24] sm:$0xf] %vm485, %v462
      %496 = vst.msk [vmem:[%s172 + $0x28] sm:$0xf] %vm485, %v463
      %497 = vst.msk [vmem:[%s172 + $0x2c] sm:$0xf] %vm485, %v464
      %498 = vst.msk [vmem:[%s172 + $0x30] sm:$0xf] %vm485, %v465
      %499 = vst.msk [vmem:[%s172 + $0x34] sm:$0xf] %vm485, %v466
      %500 = vst.msk [vmem:[%s172 + $0x38] sm:$0xf] %vm485, %v467
      %501 = vst.msk [vmem:[%s172 + $0x3c] sm:$0xf] %vm485, %v468
      %502 = vst.msk [vmem:[%s172 + $0x40] sm:$0xf] %vm485, %v469
      %503 = vst.msk [vmem:[%s172 + $0x44] sm:$0xf] %vm485, %v470
      %504 = vst.msk [vmem:[%s172 + $0x48] sm:$0xf] %vm485, %v471
      %505 = vst.msk [vmem:[%s172 + $0x4c] sm:$0xf] %vm485, %v472
      %506 = vst.msk [vmem:[%s172 + $0x50] sm:$0xf] %vm485, %v473
      %507 = vst.msk [vmem:[%s172 + $0x54] sm:$0xf] %vm485, %v474
      %508 = vst.msk [vmem:[%s172 + $0x58] sm:$0xf] %vm485, %v475
      %509 = vst.msk [vmem:[%s172 + $0x5c] sm:$0xf] %vm485, %v476
      %510 = vst.msk [vmem:[%s172 + $0x60] sm:$0xf] %vm485, %v477
      %511 = vst.msk [vmem:[%s172 + $0x64] sm:$0xf] %vm485, %v478
      %512 = vst.msk [vmem:[%s172 + $0x68] sm:$0xf] %vm485, %v479
      %513 = vst.msk [vmem:[%s172 + $0x6c] sm:$0xf] %vm485, %v480
      %514 = vst.msk [vmem:[%s172 + $0x70] sm:$0xf] %vm485, %v481
      %515 = vst.msk [vmem:[%s172 + $0x74] sm:$0xf] %vm485, %v482
      %516 = vst.msk [vmem:[%s172 + $0x78] sm:$0xf] %vm485, %v483
      %517 = vst.msk [vmem:[%s172 + $0x7c] sm:$0xf] %vm485, %v484
      %s518 = smul.u32 32, %s14
      %p519 = scmp.lt.s32.totalorder %s518, 63
      %s520 = scalar_select %p519, %s518, 63
      %s521 = smul.addr %s520, 4
      %s522 = scalar_lea.vmem %s3, %s521
      // Predicated region
      $region33: #{tpu_custom_call.1} parent=31 // pred_check
        %p523 = pneg %p100
      $region34: #{tpu_custom_call.1} parent=31 // pred_check_branch
        %525 = sbr.rel (%p523) target = $region36
      $region35: #{tpu_custom_call.1} parent=31 // pred_region
        %s526 = smul.u32 32, %s14
      $region36: #{tpu_custom_call.1} parent=31 // pred_fallthru
        _
    $region32: #{tpu_custom_call.1} parent=5 // pred_fallthru
      _
    %p527 = scmp.le.s32.totalorder 2, %s9
    // Predicated region
    $region37: #{tpu_custom_call.1} parent=5 // pred_check
      %p528 = pneg %p527
    $region38: #{tpu_custom_call.1} parent=5 // pred_check_branch
      %530 = sbr.rel (%p528) target = $region40
    $region39: #{tpu_custom_call.1} parent=5 // pred_region
      %s531 = ssub.s32 %s9, 2
      // Predicated region
      $region41: #{tpu_custom_call.1} parent=39 // pred_check
        %p532 = pneg %p106
      $region42: #{tpu_custom_call.1} parent=39 // pred_check_branch
        %534 = sbr.rel (%p532) target = $region44
      $region43: #{tpu_custom_call.1} parent=39 // pred_region
        %s535 = smul.u32 32, %s15
        %p536 = scmp.lt.s32.totalorder %s535, 63
        %s537 = scalar_select %p536, %s535, 63
        %s538 = smul.addr %s537, 4
        %s539 = scalar_lea.vmem %s3, %s538
      $region44: #{tpu_custom_call.1} parent=39 // pred_fallthru
        _
    $region40: #{tpu_custom_call.1} parent=5 // pred_fallthru
      _
  $region6: #{tpu_custom_call.1} parent=0 // loop_footer
    %s13 = sadd.s32 1, %s9
  $region7: #{tpu_custom_call.1} parent=0 // loop_footer_branch
    %8 = sbr.rel target = $region3
  $region8: #{tpu_custom_call.1} parent=0 // loop_exit
    _

</llo_original>
